<compile_context>
chip_gen: v5e
topology: v5e:2x2
jax: 0.10.0
libtpu: 0.0.40
codegen_flags: <defaults>
</compile_context>

<pallas_src>
import math

import jax
import jax.numpy as jnp
import numpy as np
from jax.experimental import pallas as pl
from jax.experimental.pallas import tpu as pltpu

# Tile caps (rows of 128 rays per grid step).
MAX_ROWS_SHARED = 512    # shared K & T: 5 streamed rows -> ~1.25 MiB/step
MAX_ROWS_STREAMED = 256  # per-ray K and/or T: up to 18 rows -> ~2.25 MiB/step


def _round_up(x, m):
    return ((x + m - 1) // m) * m


# --------------------------------------------------------------------------
# Kernel: rays_d only, (C, R, 128) slabs, shared camera params in SMEM.
# --------------------------------------------------------------------------
def _make_rays_d_kernel(shared_k: bool, shared_t: bool,
                        normalize_dir: bool, openGL_coord: bool):
    """Ref order: [cam_smem?] uv [intr?] [rot?] d_out.

    cam_smem (SMEM f32[13]) = [cx, cy, 1/fx, 1/fy, R row-major (9)]
      (K part only valid if shared_k, R part only valid if shared_t).
    uv   : f32[2, R, 128]
    intr : f32[4, R, 128]  (cx, cy, fx, fy)   -- only if K is per-ray
    rot  : f32[9, R, 128]  (row-major R)      -- only if T is per-ray
    d_out: f32[3, R, 128]
    """

    def kernel(*refs):
        i = 0
        cam_ref = None
        if shared_k or shared_t:
            cam_ref = refs[i]; i += 1
        uv_ref = refs[i]; i += 1
        intr_ref = None
        if not shared_k:
            intr_ref = refs[i]; i += 1
        rot_ref = None
        if not shared_t:
            rot_ref = refs[i]; i += 1
        d_ref = refs[i]

        u = uv_ref[0]                       # (R, 128) full slabs
        v = uv_ref[1]

        if shared_k:
            cx, cy = cam_ref[0], cam_ref[1]
            ifx, ify = cam_ref[2], cam_ref[3]     # reciprocals from wrapper
            dx = (u - cx) * ifx
            # openGL: dy is negated -> fold the sign into the subtraction.
            dy = ((cy - v) if openGL_coord else (v - cy)) * ify
        else:
            cx, cy = intr_ref[0], intr_ref[1]
            fx, fy = intr_ref[2], intr_ref[3]
            dx = (u - cx) / fx
            dy = ((cy - v) if openGL_coord else (v - cy)) / fy

        if shared_t:
            r = [cam_ref[4 + k] for k in range(9)]
        else:
            r = [rot_ref[k] for k in range(9)]

        # dz is constant (+1, or -1 for openGL): fold it into an add/sub of the
        # rotation's third column instead of materializing a dz slab.
        def apply_row(a, b, c):
            base = a * dx + b * dy
            return (base - c) if openGL_coord else (base + c)

        d0 = apply_row(r[0], r[1], r[2])
        d1 = apply_row(r[3], r[4], r[5])
        d2 = apply_row(r[6], r[7], r[8])

        if normalize_dir:
            inv = jax.lax.rsqrt(d0 * d0 + d1 * d1 + d2 * d2)
            d0 = d0 * inv
            d1 = d1 * inv
            d2 = d2 * inv

        d_ref[0] = d0
        d_ref[1] = d1
        d_ref[2] = d2

    return kernel


# --------------------------------------------------------------------------
# Glue
# --------------------------------------------------------------------------
def _extract_intrinsics(K):
    """K: [M,3]=(H,W,f) | [M,4]=(H,W,fx,fy) | [M,3,3]  ->  [4, M] = (cx,cy,fx,fy)."""
    K = jnp.asarray(K, jnp.float32)
    if K.ndim == 2 and K.shape[-1] == 3:
        H, W, f = K[:, 0], K[:, 1], K[:, 2]
        fx, fy = f, f
        cx, cy = W * 0.5, H * 0.5
    elif K.ndim == 2 and K.shape[-1] == 4:
        H, W, fx, fy = K[:, 0], K[:, 1], K[:, 2], K[:, 3]
        cx, cy = W * 0.5, H * 0.5
    elif K.ndim == 3 and K.shape[-2:] == (3, 3):
        fx, fy = K[:, 0, 0], K[:, 1, 1]
        cx, cy = K[:, 0, 2], K[:, 1, 2]
    else:
        raise ValueError(f"unsupported K shape {K.shape}")
    return jnp.stack([cx, cy, fx, fy], axis=0)


def _to_lanes(x_cn, n, n_pad, rows):
    """[C, n] -> [C, rows, 128] lane-dense slab (pads the ray axis)."""
    if n_pad != n:
        x_cn = jnp.pad(x_cn, ((0, 0), (0, n_pad - n)))
    return x_cn.reshape(x_cn.shape[0], rows, 128)


def camera_rays_forward(uv, K, T, gt_rgb=None, *,
                        normalize_dir: bool = False,
                        openGL_coord: bool = True):
    """Pallas equivalent of CameraRays.forward(uv, idx=None, dataset=None,
    gt_rgb, K, T).  Returns (rays_o, rays_d, gt_rgb); rays_* are [N, 3]."""
    uv = jnp.asarray(uv, jnp.float32)
    K = jnp.asarray(K, jnp.float32)
    T = jnp.asarray(T, jnp.float32)
    n = uv.shape[0]

    # TODO(synk): the (idx, dataset) gather path of the PyTorch module is not
    # implemented; K and T must be passed explicitly.
    # TODO(synk): the [N|1, 4, 3] extrinsic layout from the docstring is
    # ambiguous; only [N|1, 4, 4] / [N|1, 3, 4] camera-to-world matrices are
    # supported.
    if T.ndim != 3 or T.shape[-1] != 4 or T.shape[-2] not in (3, 4):
        raise ValueError(f"unsupported T shape {T.shape}")

    intr = _extract_intrinsics(K)                       # [4, M_K]
    rot3 = T[:, :3, :3]                                 # [M_T, 3, 3]
    trans3 = T[:, :3, 3]                                # [M_T, 3]

    m_k, m_t = intr.shape[1], T.shape[0]
    shared_k = (m_k == 1)
    shared_t = (m_t == 1)
    if not shared_k and m_k != n:
        raise ValueError(f"K leading dim must be 1 or N, got {m_k} (N={n})")
    if not shared_t and m_t != n:
        raise ValueError(f"T leading dim must be 1 or N, got {m_t} (N={n})")

    # rays_o is just the (broadcast) camera translation: never goes through
    # the kernel, no HBM writes / transposes for it.
    rays_o = jnp.broadcast_to(trans3, (n, 3)) if shared_t else trans3

    # Lane-dense padded layout: 128 rays per sublane row; rows multiple of 8.
    n_pad = _round_up(max(n, 1), 1024)
    rows = n_pad // 128

    # Tile rows: as big as the VMEM budget comfortably allows, but split in
    # two when possible so the "parallel" grid axis keeps both v7x TCs busy.
    cap = MAX_ROWS_SHARED if (shared_k and shared_t) else MAX_ROWS_STREAMED
    tile_rows = min(cap, max(8, _round_up(pl.cdiv(rows, 2), 8)))
    tile_rows = min(tile_rows, rows)
    grid = (pl.cdiv(rows, tile_rows),)

    inputs = []
    in_specs = []

    if shared_k or shared_t:
        # 13 camera scalars ride in SMEM (reciprocal focal lengths precomputed
        # in the wrapper -> kernel uses multiplies, not divides).
        if shared_k:
            k_part = jnp.stack([intr[0, 0], intr[1, 0],
                                1.0 / intr[2, 0], 1.0 / intr[3, 0]])
        else:
            k_part = jnp.zeros((4,), jnp.float32)
        if shared_t:
            t_part = rot3[0].reshape(9)
        else:
            t_part = jnp.zeros((9,), jnp.float32)
        inputs.append(jnp.concatenate([k_part, t_part]).astype(jnp.float32))
        in_specs.append(pl.BlockSpec(memory_space=pltpu.MemorySpace.SMEM))

    inputs.append(_to_lanes(uv.T, n, n_pad, rows))                     # [2,rows,128]
    in_specs.append(pl.BlockSpec((2, tile_rows, 128), lambda i: (0, i, 0)))

    if not shared_k:
        inputs.append(_to_lanes(intr, n, n_pad, rows))                 # [4,rows,128]
        in_specs.append(pl.BlockSpec((4, tile_rows, 128), lambda i: (0, i, 0)))

    if not shared_t:
        rot_cn = rot3.reshape(n, 9).T                                  # [9, n]
        inputs.append(_to_lanes(rot_cn, n, n_pad, rows))               # [9,rows,128]
        in_specs.append(pl.BlockSpec((9, tile_rows, 128), lambda i: (0, i, 0)))

    kernel = _make_rays_d_kernel(shared_k, shared_t, normalize_dir, openGL_coord)

    out3 = pl.pallas_call(
        kernel,
        out_shape=jax.ShapeDtypeStruct((3, rows, 128), jnp.float32),
        grid=grid,
        in_specs=in_specs,
        out_specs=pl.BlockSpec((3, tile_rows, 128), lambda i: (0, i, 0)),
        compiler_params=pltpu.CompilerParams(dimension_semantics=("parallel",)),
    )(*inputs)

    # Slice before transposing: single [3, n] -> [n, 3] layout conversion.
    rays_d = out3.reshape(3, n_pad)[:, :n].T
    return rays_o, rays_d, gt_rgb


# --------------------------------------------------------------------------
# Pure-JAX reference (mirrors accelRF get_rays_uv) for correctness check
# --------------------------------------------------------------------------
def camera_rays_ref(uv, K, T, *, normalize_dir=False, openGL_coord=True):
    uv = jnp.asarray(uv, jnp.float32)
    n = uv.shape[0]
    intr = jnp.broadcast_to(_extract_intrinsics(K), (4, n))
    cx, cy, fx, fy = intr[0], intr[1], intr[2], intr[3]
    u, v = uv[:, 0], uv[:, 1]
    dx = (u - cx) / fx
    dy = (v - cy) / fy
    if openGL_coord:
        dirs = jnp.stack([dx, -dy, -jnp.ones_like(dx)], -1)
    else:
        dirs = jnp.stack([dx, dy, jnp.ones_like(dx)], -1)
    T = jnp.asarray(T, jnp.float32)
    R = jnp.broadcast_to(T[:, :3, :3], (n, 3, 3))
    t = jnp.broadcast_to(T[:, :3, 3], (n, 3))
    rays_d = jnp.sum(dirs[:, None, :] * R, -1)
    if normalize_dir:
        rays_d = rays_d / jnp.linalg.norm(rays_d, axis=-1, keepdims=True)
    return t, rays_d


# --------------------------------------------------------------------------
if __name__ == "__main__":
    key = jax.random.PRNGKey(0)
    k_uv, k_rgb, k_f, k_t = jax.random.split(key, 4)

    H = W = 16.0
    focal = 20.0
    c, s = math.cos(0.3), math.sin(0.3)
    T1 = jnp.array([[[c, 0.0, s, 0.5],
                     [0.0, 1.0, 0.0, 1.0],
                     [-s, 0.0, c, 2.0],
                     [0.0, 0.0, 0.0, 1.0]]], dtype=jnp.float32)
    K1 = jnp.array([[H, W, focal]], dtype=jnp.float32)

    def check(uv, K, T, gt_rgb, norm, gl):
        rays_o, rays_d, rgb = camera_rays_forward(
            uv, K, T, gt_rgb, normalize_dir=norm, openGL_coord=gl)
        jax.block_until_ready((rays_o, rays_d))
        ref_o, ref_d = camera_rays_ref(uv, K, T, normalize_dir=norm, openGL_coord=gl)
        assert rays_o.shape == (uv.shape[0], 3) and rays_d.shape == (uv.shape[0], 3)
        np.testing.assert_allclose(np.asarray(rays_o), np.asarray(ref_o),
                                   rtol=1e-5, atol=1e-5)
        np.testing.assert_allclose(np.asarray(rays_d), np.asarray(ref_d),
                                   rtol=1e-5, atol=1e-5)
        if gt_rgb is not None:
            np.testing.assert_allclose(np.asarray(rgb), np.asarray(gt_rgb))

    # N=300 exercises the padded tail / single block; N=2500 exercises a
    # multi-block grid with a ragged last block.
    for N in (300, 2500):
        uv = jax.random.uniform(jax.random.fold_in(k_uv, N), (N, 2),
                                dtype=jnp.float32, minval=0.0, maxval=16.0)
        gt_rgb = jax.random.uniform(jax.random.fold_in(k_rgb, N), (N, 3),
                                    dtype=jnp.float32)

        # ---- shared camera: K [1,3], T [1,4,4] ----------------------------
        for norm in (False, True):
            check(uv, K1, T1, gt_rgb, norm, True)

        # ---- per-ray cameras: K [N,4], T [N,4,4] ---------------------------
        K_per = jnp.concatenate(
            [jnp.full((N, 2), 16.0, jnp.float32),
             20.0 + jax.random.uniform(jax.random.fold_in(k_f, N), (N, 2),
                                       dtype=jnp.float32)], axis=1)
        T_per = jnp.tile(T1, (N, 1, 1))
        T_per = T_per.at[:, :3, 3].add(
            0.1 * jax.random.normal(jax.random.fold_in(k_t, N), (N, 3),
                                    dtype=jnp.float32))
        check(uv, K_per, T_per, gt_rgb, True, False)

        # ---- mixed: shared K + per-ray T, and per-ray K + shared T ---------
        check(uv, K1, T_per, gt_rgb, False, True)
        check(uv, K_per, T1, gt_rgb, True, True)

    print("KERNEL_OK")
</pallas_src>

<mosaic_0001>
module attributes {stable_mosaic.version = 11 : i64} {
  func.func @kernel(%arg0: i32, %arg1: memref<13xf32, #tpu.memory_space<smem>>, %arg2: memref<2x8x128xf32, #tpu.memory_space<vmem>>, %arg3: memref<3x8x128xf32, #tpu.memory_space<vmem>>) attributes {dimension_semantics = [#tpu.dimension_semantics<parallel>], iteration_bounds = array<i64: 1>, scalar_prefetch = 0 : i64, scratch_operands = 0 : i64, tpu.core_type = #tpu.core_type<tc>, window_params = [{transform_indices = @transform_0, window_bounds = array<i64: 13>}, {transform_indices = @transform_1, window_bounds = array<i64: 2, 8, 128>}, {transform_indices = @transform_2, window_bounds = array<i64: 3, 8, 128>}]} {
    %c0 = arith.constant 0 : index
    %c0_0 = arith.constant 0 : index
    %c0_1 = arith.constant 0 : index
    %0 = vector.load %arg2[%c0, %c0_0, %c0_1] : memref<2x8x128xf32, #tpu.memory_space<vmem>>, vector<1x8x128xf32>
    %1 = vector.shape_cast %0 : vector<1x8x128xf32> to vector<8x128xf32>
    %c1 = arith.constant 1 : index
    %c0_2 = arith.constant 0 : index
    %c0_3 = arith.constant 0 : index
    %2 = vector.load %arg2[%c1, %c0_2, %c0_3] : memref<2x8x128xf32, #tpu.memory_space<vmem>>, vector<1x8x128xf32>
    %3 = vector.shape_cast %2 : vector<1x8x128xf32> to vector<8x128xf32>
    %c0_4 = arith.constant 0 : index
    %4 = memref.load %arg1[%c0_4] : memref<13xf32, #tpu.memory_space<smem>>
    %c1_5 = arith.constant 1 : index
    %5 = memref.load %arg1[%c1_5] : memref<13xf32, #tpu.memory_space<smem>>
    %c2 = arith.constant 2 : index
    %6 = memref.load %arg1[%c2] : memref<13xf32, #tpu.memory_space<smem>>
    %c3 = arith.constant 3 : index
    %7 = memref.load %arg1[%c3] : memref<13xf32, #tpu.memory_space<smem>>
    %8 = vector.broadcast %4 : f32 to vector<8x128xf32>
    %9 = arith.subf %1, %8 : vector<8x128xf32>
    %10 = vector.broadcast %6 : f32 to vector<8x128xf32>
    %11 = arith.mulf %9, %10 : vector<8x128xf32>
    %12 = vector.broadcast %5 : f32 to vector<8x128xf32>
    %13 = arith.subf %12, %3 : vector<8x128xf32>
    %14 = vector.broadcast %7 : f32 to vector<8x128xf32>
    %15 = arith.mulf %13, %14 : vector<8x128xf32>
    %c4 = arith.constant 4 : index
    %16 = memref.load %arg1[%c4] : memref<13xf32, #tpu.memory_space<smem>>
    %c5 = arith.constant 5 : index
    %17 = memref.load %arg1[%c5] : memref<13xf32, #tpu.memory_space<smem>>
    %c6 = arith.constant 6 : index
    %18 = memref.load %arg1[%c6] : memref<13xf32, #tpu.memory_space<smem>>
    %c7 = arith.constant 7 : index
    %19 = memref.load %arg1[%c7] : memref<13xf32, #tpu.memory_space<smem>>
    %c8 = arith.constant 8 : index
    %20 = memref.load %arg1[%c8] : memref<13xf32, #tpu.memory_space<smem>>
    %c9 = arith.constant 9 : index
    %21 = memref.load %arg1[%c9] : memref<13xf32, #tpu.memory_space<smem>>
    %c10 = arith.constant 10 : index
    %22 = memref.load %arg1[%c10] : memref<13xf32, #tpu.memory_space<smem>>
    %c11 = arith.constant 11 : index
    %23 = memref.load %arg1[%c11] : memref<13xf32, #tpu.memory_space<smem>>
    %c12 = arith.constant 12 : index
    %24 = memref.load %arg1[%c12] : memref<13xf32, #tpu.memory_space<smem>>
    %25 = vector.broadcast %16 : f32 to vector<8x128xf32>
    %26 = arith.mulf %25, %11 : vector<8x128xf32>
    %27 = vector.broadcast %17 : f32 to vector<8x128xf32>
    %28 = arith.mulf %27, %15 : vector<8x128xf32>
    %29 = arith.addf %26, %28 : vector<8x128xf32>
    %30 = vector.broadcast %18 : f32 to vector<8x128xf32>
    %31 = arith.subf %29, %30 : vector<8x128xf32>
    %32 = vector.broadcast %19 : f32 to vector<8x128xf32>
    %33 = arith.mulf %32, %11 : vector<8x128xf32>
    %34 = vector.broadcast %20 : f32 to vector<8x128xf32>
    %35 = arith.mulf %34, %15 : vector<8x128xf32>
    %36 = arith.addf %33, %35 : vector<8x128xf32>
    %37 = vector.broadcast %21 : f32 to vector<8x128xf32>
    %38 = arith.subf %36, %37 : vector<8x128xf32>
    %39 = vector.broadcast %22 : f32 to vector<8x128xf32>
    %40 = arith.mulf %39, %11 : vector<8x128xf32>
    %41 = vector.broadcast %23 : f32 to vector<8x128xf32>
    %42 = arith.mulf %41, %15 : vector<8x128xf32>
    %43 = arith.addf %40, %42 : vector<8x128xf32>
    %44 = vector.broadcast %24 : f32 to vector<8x128xf32>
    %45 = arith.subf %43, %44 : vector<8x128xf32>
    %c0_6 = arith.constant 0 : index
    %c0_7 = arith.constant 0 : index
    %c0_8 = arith.constant 0 : index
    %46 = vector.load %arg3[%c0_6, %c0_7, %c0_8] : memref<3x8x128xf32, #tpu.memory_space<vmem>>, vector<1x8x128xf32>
    %47 = vector.shape_cast %46 : vector<1x8x128xf32> to vector<8x128xf32>
    %48 = vector.shape_cast %31 : vector<8x128xf32> to vector<1x8x128xf32>
    tpu.vector_store %arg3[%c0_6, %c0_7, %c0_8], %48 {strides = array<i32>} : memref<3x8x128xf32, #tpu.memory_space<vmem>>, vector<1x8x128xf32>,
    %c1_9 = arith.constant 1 : index
    %c0_10 = arith.constant 0 : index
    %c0_11 = arith.constant 0 : index
    %49 = vector.load %arg3[%c1_9, %c0_10, %c0_11] : memref<3x8x128xf32, #tpu.memory_space<vmem>>, vector<1x8x128xf32>
    %50 = vector.shape_cast %49 : vector<1x8x128xf32> to vector<8x128xf32>
    %51 = vector.shape_cast %38 : vector<8x128xf32> to vector<1x8x128xf32>
    tpu.vector_store %arg3[%c1_9, %c0_10, %c0_11], %51 {strides = array<i32>} : memref<3x8x128xf32, #tpu.memory_space<vmem>>, vector<1x8x128xf32>,
    %c2_12 = arith.constant 2 : index
    %c0_13 = arith.constant 0 : index
    %c0_14 = arith.constant 0 : index
    %52 = vector.load %arg3[%c2_12, %c0_13, %c0_14] : memref<3x8x128xf32, #tpu.memory_space<vmem>>, vector<1x8x128xf32>
    %53 = vector.shape_cast %52 : vector<1x8x128xf32> to vector<8x128xf32>
    %54 = vector.shape_cast %45 : vector<8x128xf32> to vector<1x8x128xf32>
    tpu.vector_store %arg3[%c2_12, %c0_13, %c0_14], %54 {strides = array<i32>} : memref<3x8x128xf32, #tpu.memory_space<vmem>>, vector<1x8x128xf32>,
    return
  }
  func.func @transform_0(%arg0: i32) -> i32 {
    %c0_i32 = arith.constant 0 : i32
    %c0_i32_0 = arith.constant 0 : i32
    return %c0_i32 : i32
  }
  func.func @transform_1(%arg0: i32) -> (i32, i32, i32) {
    %c0_i32 = arith.constant 0 : i32
    %c0_i32_0 = arith.constant 0 : i32
    %c0_i32_1 = arith.constant 0 : i32
    return %c0_i32, %arg0, %c0_i32_0 : i32, i32, i32
  }
  func.func @transform_2(%arg0: i32) -> (i32, i32, i32) {
    %c0_i32 = arith.constant 0 : i32
    %c0_i32_0 = arith.constant 0 : i32
    %c0_i32_1 = arith.constant 0 : i32
    return %c0_i32, %arg0, %c0_i32_0 : i32, i32, i32
  }
}

</mosaic_0001>

<llo_original>
// kernel: tpu_custom_call.1
$region0: #{tpu_custom_call.1}
  #allocation0 [shape = 'u32[]', space=smem, size = 0x4, offset = 0x4, fixed_abs, tag = 'smem constant byte address 0x4 - core index']
  #allocation1 [shape = 'u32[72,128]{1,0:T(1,128)}', space=vmem, size = 0x9000, scoped, tag = 'internal scratch']
  %s0 = inlined_call_operand.hbm [shape: f32[13], index: 0, kind: input, shape index: {}]
  %s1 = inlined_call_operand.hbm [shape: f32[2,8,128], index: 1, kind: input, shape index: {}]
  %s2 = inlined_call_operand.hbm [shape: f32[3,8,128], index: 2, kind: output, shape index: {}]
  %s3 = sld [smem:[#allocation0]]
  $region26: #{tpu_custom_call.1} parent=0
    _
  %s5 = ssub.s32 1, %s3
  %s6 = scalar_select 0, %s5, %s3
  $region1: #{tpu_custom_call.1} parent=0
    #allocation2 [shape = 'u8[512]{0}', space=smem, size = 0x200, scoped, tag = 'input window, operand 0, single buffered']
    #allocation3 [shape = 's32[1]{0}', space=sflag, size = 0x4, scoped, tag = 'scoped memory for tpu_custom_call.1']
    #allocation4 [shape = 's32[1]{0}', space=sflag, size = 0x4, scoped, tag = 'scoped memory for tpu_custom_call.1']
    #allocation5 [shape = 's32[1]{0}', space=sflag, size = 0x4, scoped, tag = 'scoped memory for tpu_custom_call.1']
    #allocation6 [shape = 'u8[8192]{0}', space=vmem, size = 0x2000, scoped, tag = 'input window, operand 1, single buffered']
    #allocation7 [shape = 'u8[12288]{0}', space=vmem, size = 0x3000, scoped, tag = 'output window, operand 0, single buffered']
    %7 = vsyncpa [#allocation5], 0
    %8 = vsyncpa [#allocation3], 0
    %9 = vsyncpa [#allocation4], 0
    // Predicated region
    $region2: #{tpu_custom_call.1} parent=1 // pred_check
      _
    $region3: #{tpu_custom_call.1} parent=1 // pred_check_branch
      %11 = sbr.rel (0) target = $region5
    $region4: #{tpu_custom_call.1} parent=1 // pred_region
      %13 = vsyncadd [#allocation5], 0
      %s15 = sshll.u32 %s0, 4
      %s16 = int_to_ptr.hbm [resolvable:$true] %s15
      %18 = dma.hbm_to_smem %s16, 16, [#allocation2], [#allocation5]
    $region5: #{tpu_custom_call.1} parent=1 // pred_fallthru
      _
    // Predicated region
    $region6: #{tpu_custom_call.1} parent=1 // pred_check
      _
    $region7: #{tpu_custom_call.1} parent=1 // pred_check_branch
      %20 = sbr.rel (0) target = $region9
    $region8: #{tpu_custom_call.1} parent=1 // pred_region
      %22 = vsyncadd [#allocation3], 0
      %s23 = sshll.u32 %s1, 4
      %s24 = int_to_ptr.hbm [resolvable:$true] %s23
      %s25 = sshll.u32 [#allocation6], 4
      %s26 = int_to_ptr.vmem [resolvable:$true] %s25
      %31 = dma.hbm_to_vmem [thread:$0]  %s24, 256, %s26, [#allocation3], 128, 128, 8
    $region9: #{tpu_custom_call.1} parent=1 // pred_fallthru
      _
    // Predicated region
    $region10: #{tpu_custom_call.1} parent=1 // pred_check
      _
    $region11: #{tpu_custom_call.1} parent=1 // pred_check_branch
      %33 = sbr.rel (0) target = $region13
    $region12: #{tpu_custom_call.1} parent=1 // pred_region
      %35 = dma.done [#allocation5], 16
    $region13: #{tpu_custom_call.1} parent=1 // pred_fallthru
      _
    // Predicated region
    $region14: #{tpu_custom_call.1} parent=1 // pred_check
      _
    $region15: #{tpu_custom_call.1} parent=1 // pred_check_branch
      %37 = sbr.rel (0) target = $region17
    $region16: #{tpu_custom_call.1} parent=1 // pred_region
      %39 = dma.done [#allocation3], 256
    $region17: #{tpu_custom_call.1} parent=1 // pred_fallthru
      _
    %40 = sfence
    %v41 = vld [vmem:[#allocation6] sm:$0xff]
    %s42 = scalar_lea.vmem [#allocation6], 8
    %v43 = vld [vmem:[%s42] sm:$0xff]
    %s44 = sld [smem:[#allocation2]]
    %s45 = sld [smem:[#allocation2 + $0x1]]
    %s46 = sld [smem:[#allocation2 + $0x2]]
    %s47 = sld [smem:[#allocation2 + $0x3]]
    %v48 = vstv %s44
    %v49 = vsub.f32 %v41, %v48
    %v50 = vstv %s46
    %v51 = vmul.f32 %v49, %v50
    %v52 = vstv %s45
    %v53 = vsub.f32 %v52, %v43
    %v54 = vstv %s47
    %v55 = vmul.f32 %v53, %v54
    %s56 = sld [smem:[#allocation2 + $0x4]]
    %s57 = sld [smem:[#allocation2 + $0x5]]
    %s58 = sld [smem:[#allocation2 + $0x6]]
    %s59 = sld [smem:[#allocation2 + $0x7]]
    %s60 = sld [smem:[#allocation2 + $0x8]]
    %s61 = sld [smem:[#allocation2 + $0x9]]
    %s62 = sld [smem:[#allocation2 + $0xa]]
    %s63 = sld [smem:[#allocation2 + $0xb]]
    %s64 = sld [smem:[#allocation2 + $0xc]]
    %v65 = vstv %s56
    %v66 = vmul.f32 %v65, %v51
    %v67 = vstv %s57
    %v68 = vmul.f32 %v67, %v55
    %v69 = vadd.f32 %v66, %v68
    %v70 = vstv %s58
    %v71 = vsub.f32 %v69, %v70
    %v72 = vstv %s59
    %v73 = vmul.f32 %v72, %v51
    %v74 = vstv %s60
    %v75 = vmul.f32 %v74, %v55
    %v76 = vadd.f32 %v73, %v75
    %v77 = vstv %s61
    %v78 = vsub.f32 %v76, %v77
    %v79 = vstv %s62
    %v80 = vmul.f32 %v79, %v51
    %v81 = vstv %s63
    %v82 = vmul.f32 %v81, %v55
    %v83 = vadd.f32 %v80, %v82
    %v84 = vstv %s64
    %v85 = vsub.f32 %v83, %v84
    %86 = vst [vmem:[#allocation7] sm:$0xff] %v71
    %s87 = scalar_lea.vmem [#allocation7], 8
    %88 = vst [vmem:[%s87] sm:$0xff] %v78
    %s89 = scalar_lea.vmem [#allocation7], 16
    %90 = vst [vmem:[%s89] sm:$0xff] %v85
    // Predicated region
    $region18: #{tpu_custom_call.1} parent=1 // pred_check
      _
    $region19: #{tpu_custom_call.1} parent=1 // pred_check_branch
      %92 = sbr.rel (0) target = $region21
    $region20: #{tpu_custom_call.1} parent=1 // pred_region
      %94 = vsyncadd [#allocation4], 0
      %s95 = sshll.u32 [#allocation7], 4
      %s96 = int_to_ptr.vmem [resolvable:$true] %s95
      %s97 = sshll.u32 %s2, 4
      %s98 = int_to_ptr.hbm [resolvable:$true] %s97
      %103 = dma.vmem_to_hbm [thread:$0]  %s96, 384, %s98, [#allocation4], 128, 128, 8
    $region21: #{tpu_custom_call.1} parent=1 // pred_fallthru
      _
    // Predicated region
    $region22: #{tpu_custom_call.1} parent=1 // pred_check
      _
    $region23: #{tpu_custom_call.1} parent=1 // pred_check_branch
      %105 = sbr.rel (0) target = $region25
    $region24: #{tpu_custom_call.1} parent=1 // pred_region
      %107 = dma.done [#allocation4], 384
    $region25: #{tpu_custom_call.1} parent=1 // pred_fallthru
      _
    %108 = vsyncpa [#allocation3], 1
    %109 = vsyncpa [#allocation4], 1
    %110 = vsyncpa [#allocation5], 1

</llo_original>
